<compile_context>
chip_gen: v7x
topology: tpu7x:2x2x1
jax: 0.10.0
libtpu: 0.0.40
codegen_flags: <defaults>
</compile_context>

<pallas_src>
import functools

import jax
import jax.numpy as jnp
from jax.experimental import pallas as pl
from jax.experimental.pallas import tpu as pltpu

_LANE = 128
_X_BLOCK_BUDGET = 4 * 1024 * 1024     # bytes of logits streamed per grid step
_MAX_ROWS = 4096                      # cap on (S/128)-rows per tile
_UNROLL_MAX_CLASSES = 32


def _choose_tiling(sb_total, num_classes, x_itemsize):
    """Pick (sb_tile, n_par, n_inner) for the (S/128)-row spatial axis."""
    # Sublane granularity keeping the block legal for the packed layout of the
    # logits dtype (f32 -> 8, bf16/f16 -> 16, fp8/int8 -> 32).
    g = max(8, 32 // x_itemsize)
    max_rows = _X_BLOCK_BUDGET // (num_classes * _LANE * x_itemsize)
    max_rows = min(_MAX_ROWS, (max_rows // g) * g)
    max_rows = max(max_rows, g)

    if sb_total <= max_rows:
        if sb_total < 2 * g:
            # Too small to split: one block covering the full spatial dim
            # (full-extent blocks are always layout-legal).
            return sb_total, 1, 1
        # Fits in VMEM, but split into two parallel chunks so both v7x
        # TensorCores have work even when the batch axis is tiny.
        sb_tile = -(-sb_total // (2 * g)) * g      # ~cdiv(sb_total, 2), rounded to g
        return sb_tile, 2, 1

    sb_tile = max_rows
    num_tiles = pl.cdiv(sb_total, sb_tile)
    n_par = 2 if num_tiles >= 2 else 1
    n_inner = pl.cdiv(num_tiles, n_par)
    return sb_tile, n_par, n_inner


def _dice_partial_kernel(x_ref, t_ref, out_ref, *, num_classes, sb_tile, n_inner,
                         s_elems, ragged, unroll):
    i = pl.program_id(2)

    @pl.when(i == 0)
    def _():
        out_ref[...] = jnp.zeros_like(out_ref)

    x = x_ref[0].astype(jnp.float32)          # (C, SB_TILE, 128) logits (upcast here)
    t = t_ref[0]                              # (SB_TILE, 128) integer class ids

    if ragged:
        # Ragged tail (tile divisibility / chunk split / S not lane-aligned):
        # gate every accumulator update with the true element position.
        s_global = pl.program_id(1) * n_inner + i
        base = s_global * (sb_tile * _LANE)
        row = jax.lax.broadcasted_iota(jnp.int32, (sb_tile, _LANE), 0)
        lane = jax.lax.broadcasted_iota(jnp.int32, (sb_tile, _LANE), 1)
        pos_ok = (base + row * _LANE + lane) < s_elems
    else:
        pos_ok = None

    nc = num_classes
    if unroll:
        # Small C: per-plane (VPU) softmax and per-class compares against
        # Python constants -- no broadcasted_iota, no wasted sublanes.
        planes = [x[c] for c in range(nc)]
        m = planes[0]
        for c in range(1, nc):
            m = jnp.maximum(m, planes[c])
        e = [jnp.exp(pc - m) for pc in planes]
        denom = e[0]
        for c in range(1, nc):
            denom = denom + e[c]
        inv = pl.reciprocal(denom)            # exact; approx would loosen accuracy

        inter, psum, cnt = [], [], []
        for c in range(nc):
            p_c = e[c] * inv
            match = t == c
            if ragged:
                match = jnp.logical_and(match, pos_ok)
                p_v = jnp.where(pos_ok, p_c, 0.0)
            else:
                p_v = p_c
            inter.append(jnp.sum(jnp.where(match, p_c, 0.0), axis=0, keepdims=True))
            psum.append(jnp.sum(p_v, axis=0, keepdims=True))
            cnt.append(jnp.sum(match.astype(jnp.float32), axis=0, keepdims=True))
        inter_p = jnp.concatenate(inter, axis=0)       # (C, 128)
        psum_p = jnp.concatenate(psum, axis=0)
        cnt_p = jnp.concatenate(cnt, axis=0)
    else:
        # Large-C fallback: vectorized over the class plane axis.
        m = jnp.max(x, axis=0, keepdims=True)
        e = jnp.exp(x - m)
        inv = pl.reciprocal(jnp.sum(e, axis=0, keepdims=True))
        p = e * inv                                               # (C, SB, 128)
        cls = jax.lax.broadcasted_iota(jnp.int32, p.shape, 0)
        match = cls == t.astype(jnp.int32)[None]
        if ragged:
            match = jnp.logical_and(match, pos_ok[None])
            p_v = jnp.where(pos_ok[None], p, 0.0)
        else:
            p_v = p
        inter_p = jnp.sum(jnp.where(match, p, 0.0), axis=1)       # (C, 128)
        psum_p = jnp.sum(p_v, axis=1)
        cnt_p = jnp.sum(match.astype(jnp.float32), axis=1)

    out_ref[0, 0, 0:nc] += inter_p            # intersection partials
    out_ref[0, 0, nc:2 * nc] += psum_p        # sum-of-probabilities partials
    out_ref[0, 0, 2 * nc:3 * nc] += cnt_p     # one-hot count partials


def dice_loss(inputs, targets, smooth=1e-5, reduction="mean"):
    """inputs: (N, C, *spatial) float logits; targets: (N, *spatial) int ids."""
    N, C = inputs.shape[0], inputs.shape[1]
    S = 1
    for d in inputs.shape[2:]:
        S *= d
    x_itemsize = jnp.dtype(inputs.dtype).itemsize

    sb_total = pl.cdiv(S, _LANE)
    s_pad = sb_total * _LANE

    x = inputs.reshape(N, C, S)
    t = targets.reshape(N, S)
    if not jnp.issubdtype(t.dtype, jnp.integer):
        t = t.astype(jnp.int32)

    if s_pad != S:
        # Rare case (spatial size not a multiple of 128): pad to the next lane
        # multiple so the lane-dense (S/128, 128) reshape is possible.  The
        # padded tail is excluded inside the kernel via the position mask.
        # TODO(synk): a flat-S layout could avoid this copy at the cost of a
        # sublane-axis softmax; not worth it for common image shapes.
        x = jnp.pad(x, ((0, 0), (0, 0), (0, s_pad - S)))
        t = jnp.pad(t, ((0, 0), (0, s_pad - S)))

    sb_tile, n_par, n_inner = _choose_tiling(sb_total, C, x_itemsize)
    num_tiles = pl.cdiv(sb_total, sb_tile)
    ragged = (n_par * n_inner * sb_tile * _LANE) != S
    clamp = (n_par * n_inner) != num_tiles

    # Targets: keep narrow integer dtypes in HBM when the tile is compatible
    # with their packed (16/32, 128) layout; upcast happens inside the kernel.
    t_itemsize = jnp.dtype(t.dtype).itemsize
    if t_itemsize > 4 or (t_itemsize < 4 and sb_tile % (32 // t_itemsize) != 0):
        t = t.astype(jnp.int32)
        t_itemsize = 4

    x = x.reshape(N, C, sb_total, _LANE)
    t = t.reshape(N, sb_total, _LANE)

    def x_index(b, p, i):
        s = p * n_inner + i
        if clamp:
            s = jnp.minimum(s, num_tiles - 1)
        return (b, 0, s, 0)

    def t_index(b, p, i):
        s = p * n_inner + i
        if clamp:
            s = jnp.minimum(s, num_tiles - 1)
        return (b, s, 0)

    x_block_bytes = C * sb_tile * _LANE * x_itemsize
    t_block_bytes = sb_tile * _LANE * t_itemsize
    vmem_limit = max(32 * 1024 * 1024,
                     2 * (x_block_bytes + t_block_bytes) + 3 * C * _LANE * 4
                     + (2 << 20))

    kernel = functools.partial(
        _dice_partial_kernel,
        num_classes=C, sb_tile=sb_tile, n_inner=n_inner, s_elems=S,
        ragged=ragged, unroll=C <= _UNROLL_MAX_CLASSES)

    partials = pl.pallas_call(
        kernel,
        out_shape=jax.ShapeDtypeStruct((N, n_par, 3 * C, _LANE), jnp.float32),
        grid=(N, n_par, n_inner),
        in_specs=[
            pl.BlockSpec((1, C, sb_tile, _LANE), x_index),
            pl.BlockSpec((1, sb_tile, _LANE), t_index),
        ],
        out_specs=pl.BlockSpec((1, 1, 3 * C, _LANE), lambda b, p, i: (b, p, 0, 0)),
        compiler_params=pltpu.CompilerParams(
            dimension_semantics=("parallel", "parallel", "arbitrary"),
            vmem_limit_bytes=vmem_limit,
        ),
    )(x, t)

    # Tiny finalize in the wrapper: combine additive partials and form dice.
    partials = partials.reshape(N, n_par, 3, C, _LANE)
    sums = jnp.sum(partials, axis=(1, 4))              # (N, 3, C)
    inter, prob_sum, count = sums[:, 0], sums[:, 1], sums[:, 2]
    dice = (2.0 * inter + smooth) / (prob_sum + count + smooth)
    loss = 1.0 - dice                                  # (N, C)

    if reduction == "mean":
        return jnp.mean(loss)
    if reduction == "sum":
        return jnp.sum(loss)
    return loss                                        # reduction='none', as in PyTorch


def _dice_loss_ref(inputs, targets, smooth=1e-5):
    # Pure-JAX reference mirroring the PyTorch module (reduction='mean').
    N, C, H, W = inputs.shape
    onehot = jax.nn.one_hot(targets, C, dtype=jnp.float32)        # (N, H, W, C)
    onehot = jnp.transpose(onehot, (0, 3, 1, 2)).reshape(N, C, -1)
    p = jax.nn.softmax(inputs.astype(jnp.float32), axis=1).reshape(N, C, -1)
    inter = jnp.sum(p * onehot, axis=2)
    union = jnp.sum(p, axis=2) + jnp.sum(onehot, axis=2)
    dice = (2.0 * inter + smooth) / (union + smooth)
    return jnp.mean(1.0 - dice)


if __name__ == "__main__":
    key = jax.random.PRNGKey(0)
    k1, k2 = jax.random.split(key)

    N, C, H, W = 2, 4, 16, 16
    inputs = jax.random.normal(k1, (N, C, H, W), dtype=jnp.float32)
    targets = jax.random.randint(k2, (N, H, W), 0, C, dtype=jnp.int32)

    out = dice_loss(inputs, targets, smooth=1e-5, reduction="mean")
    out = jax.block_until_ready(out)

    ref = _dice_loss_ref(inputs, targets, smooth=1e-5)
    assert jnp.allclose(out, ref, atol=1e-5, rtol=1e-5), (out, ref)

    print("KERNEL_OK")
</pallas_src>

<mosaic_0001>
module attributes {stable_mosaic.version = 11 : i64} {
  func.func @_dice_partial_kernel(%arg0: i32, %arg1: i32, %arg2: i32, %arg3: memref<1x4x2x128xf32, #tpu.memory_space<vmem>>, %arg4: memref<1x2x128xi32, #tpu.memory_space<vmem>>, %arg5: memref<1x1x12x128xf32, #tpu.memory_space<vmem>>) attributes {dimension_semantics = [#tpu.dimension_semantics<parallel>, #tpu.dimension_semantics<parallel>, #tpu.dimension_semantics<arbitrary>], iteration_bounds = array<i64: 2, 1, 1>, scalar_prefetch = 0 : i64, scratch_operands = 0 : i64, tpu.core_type = #tpu.core_type<tc>, window_params = [{transform_indices = @transform_0, window_bounds = array<i64: 1, 4, 2, 128>}, {transform_indices = @transform_1, window_bounds = array<i64: 1, 2, 128>}, {transform_indices = @transform_2, window_bounds = array<i64: 1, 1, 12, 128>}]} {
    %c0_i32 = arith.constant 0 : i32
    %0 = arith.cmpi eq, %arg2, %c0_i32 : i32
    %1 = arith.extui %0 : i1 to i32
    %c0_i32_0 = arith.constant 0 : i32
    %2 = arith.cmpi ne, %1, %c0_i32_0 : i32
    scf.if %2 {
      %cst_45 = arith.constant 0.000000e+00 : f32
      %103 = vector.broadcast %cst_45 : f32 to vector<1x1x12x128xf32>
      %c0_46 = arith.constant 0 : index
      %c0_47 = arith.constant 0 : index
      %c0_48 = arith.constant 0 : index
      %c0_49 = arith.constant 0 : index
      %104 = vector.load %arg5[%c0_46, %c0_47, %c0_48, %c0_49] : memref<1x1x12x128xf32, #tpu.memory_space<vmem>>, vector<1x1x12x128xf32>
      tpu.vector_store %arg5[%c0_46, %c0_47, %c0_48, %c0_49], %103 {strides = array<i32>} : memref<1x1x12x128xf32, #tpu.memory_space<vmem>>, vector<1x1x12x128xf32>,
    } else {
    }
    %c0 = arith.constant 0 : index
    %c0_1 = arith.constant 0 : index
    %c0_2 = arith.constant 0 : index
    %c0_3 = arith.constant 0 : index
    %3 = vector.load %arg3[%c0, %c0_1, %c0_2, %c0_3] : memref<1x4x2x128xf32, #tpu.memory_space<vmem>>, vector<1x4x2x128xf32>
    %4 = vector.shape_cast %3 : vector<1x4x2x128xf32> to vector<4x2x128xf32>
    %c0_4 = arith.constant 0 : index
    %c0_5 = arith.constant 0 : index
    %c0_6 = arith.constant 0 : index
    %5 = vector.load %arg4[%c0_4, %c0_5, %c0_6] : memref<1x2x128xi32, #tpu.memory_space<vmem>>, vector<1x2x128xi32>
    %6 = vector.shape_cast %5 : vector<1x2x128xi32> to vector<2x128xi32>
    %7 = vector.extract_strided_slice %4 {offsets = [0, 0, 0], sizes = [1, 2, 128], strides = [1, 1, 1]} : vector<4x2x128xf32> to vector<1x2x128xf32>
    %8 = vector.shape_cast %7 : vector<1x2x128xf32> to vector<2x128xf32>
    %9 = vector.extract_strided_slice %4 {offsets = [1, 0, 0], sizes = [1, 2, 128], strides = [1, 1, 1]} : vector<4x2x128xf32> to vector<1x2x128xf32>
    %10 = vector.shape_cast %9 : vector<1x2x128xf32> to vector<2x128xf32>
    %11 = vector.extract_strided_slice %4 {offsets = [2, 0, 0], sizes = [1, 2, 128], strides = [1, 1, 1]} : vector<4x2x128xf32> to vector<1x2x128xf32>
    %12 = vector.shape_cast %11 : vector<1x2x128xf32> to vector<2x128xf32>
    %13 = vector.extract_strided_slice %4 {offsets = [3, 0, 0], sizes = [1, 2, 128], strides = [1, 1, 1]} : vector<4x2x128xf32> to vector<1x2x128xf32>
    %14 = vector.shape_cast %13 : vector<1x2x128xf32> to vector<2x128xf32>
    %15 = arith.maximumf %8, %10 : vector<2x128xf32>
    %16 = arith.maximumf %15, %12 : vector<2x128xf32>
    %17 = arith.maximumf %16, %14 : vector<2x128xf32>
    %18 = arith.subf %8, %17 : vector<2x128xf32>
    %19 = math.exp %18 : vector<2x128xf32>
    %20 = arith.subf %10, %17 : vector<2x128xf32>
    %21 = math.exp %20 : vector<2x128xf32>
    %22 = arith.subf %12, %17 : vector<2x128xf32>
    %23 = math.exp %22 : vector<2x128xf32>
    %24 = arith.subf %14, %17 : vector<2x128xf32>
    %25 = math.exp %24 : vector<2x128xf32>
    %26 = arith.addf %19, %21 : vector<2x128xf32>
    %27 = arith.addf %26, %23 : vector<2x128xf32>
    %28 = arith.addf %27, %25 : vector<2x128xf32>
    %29 = tpu.reciprocal %28 : vector<2x128xf32> -> vector<2x128xf32>
    %30 = arith.mulf %19, %29 : vector<2x128xf32>
    %c0_i32_7 = arith.constant 0 : i32
    %31 = vector.broadcast %c0_i32_7 : i32 to vector<2x128xi32>
    %32 = arith.cmpi eq, %6, %31 : vector<2x128xi32>
    %cst = arith.constant 0.000000e+00 : f32
    %33 = vector.broadcast %cst : f32 to vector<2x128xf32>
    %34 = arith.select %32, %30, %33 : vector<2x128xi1>, vector<2x128xf32>
    %cst_8 = arith.constant dense<0.000000e+00> : vector<128xf32>
    %35 = vector.multi_reduction <add>, %34, %cst_8 [0] : vector<2x128xf32> to vector<128xf32>
    %36 = vector.shape_cast %35 : vector<128xf32> to vector<1x128xf32>
    %cst_9 = arith.constant dense<0.000000e+00> : vector<128xf32>
    %37 = vector.multi_reduction <add>, %30, %cst_9 [0] : vector<2x128xf32> to vector<128xf32>
    %38 = vector.shape_cast %37 : vector<128xf32> to vector<1x128xf32>
    %39 = arith.extui %32 : vector<2x128xi1> to vector<2x128xi32>
    %40 = arith.sitofp %39 : vector<2x128xi32> to vector<2x128xf32>
    %cst_10 = arith.constant dense<0.000000e+00> : vector<128xf32>
    %41 = vector.multi_reduction <add>, %40, %cst_10 [0] : vector<2x128xf32> to vector<128xf32>
    %42 = vector.shape_cast %41 : vector<128xf32> to vector<1x128xf32>
    %43 = arith.mulf %21, %29 : vector<2x128xf32>
    %c1_i32 = arith.constant 1 : i32
    %44 = vector.broadcast %c1_i32 : i32 to vector<2x128xi32>
    %45 = arith.cmpi eq, %6, %44 : vector<2x128xi32>
    %cst_11 = arith.constant 0.000000e+00 : f32
    %46 = vector.broadcast %cst_11 : f32 to vector<2x128xf32>
    %47 = arith.select %45, %43, %46 : vector<2x128xi1>, vector<2x128xf32>
    %cst_12 = arith.constant dense<0.000000e+00> : vector<128xf32>
    %48 = vector.multi_reduction <add>, %47, %cst_12 [0] : vector<2x128xf32> to vector<128xf32>
    %49 = vector.shape_cast %48 : vector<128xf32> to vector<1x128xf32>
    %cst_13 = arith.constant dense<0.000000e+00> : vector<128xf32>
    %50 = vector.multi_reduction <add>, %43, %cst_13 [0] : vector<2x128xf32> to vector<128xf32>
    %51 = vector.shape_cast %50 : vector<128xf32> to vector<1x128xf32>
    %52 = arith.extui %45 : vector<2x128xi1> to vector<2x128xi32>
    %53 = arith.sitofp %52 : vector<2x128xi32> to vector<2x128xf32>
    %cst_14 = arith.constant dense<0.000000e+00> : vector<128xf32>
    %54 = vector.multi_reduction <add>, %53, %cst_14 [0] : vector<2x128xf32> to vector<128xf32>
    %55 = vector.shape_cast %54 : vector<128xf32> to vector<1x128xf32>
    %56 = arith.mulf %23, %29 : vector<2x128xf32>
    %c2_i32 = arith.constant 2 : i32
    %57 = vector.broadcast %c2_i32 : i32 to vector<2x128xi32>
    %58 = arith.cmpi eq, %6, %57 : vector<2x128xi32>
    %cst_15 = arith.constant 0.000000e+00 : f32
    %59 = vector.broadcast %cst_15 : f32 to vector<2x128xf32>
    %60 = arith.select %58, %56, %59 : vector<2x128xi1>, vector<2x128xf32>
    %cst_16 = arith.constant dense<0.000000e+00> : vector<128xf32>
    %61 = vector.multi_reduction <add>, %60, %cst_16 [0] : vector<2x128xf32> to vector<128xf32>
    %62 = vector.shape_cast %61 : vector<128xf32> to vector<1x128xf32>
    %cst_17 = arith.constant dense<0.000000e+00> : vector<128xf32>
    %63 = vector.multi_reduction <add>, %56, %cst_17 [0] : vector<2x128xf32> to vector<128xf32>
    %64 = vector.shape_cast %63 : vector<128xf32> to vector<1x128xf32>
    %65 = arith.extui %58 : vector<2x128xi1> to vector<2x128xi32>
    %66 = arith.sitofp %65 : vector<2x128xi32> to vector<2x128xf32>
    %cst_18 = arith.constant dense<0.000000e+00> : vector<128xf32>
    %67 = vector.multi_reduction <add>, %66, %cst_18 [0] : vector<2x128xf32> to vector<128xf32>
    %68 = vector.shape_cast %67 : vector<128xf32> to vector<1x128xf32>
    %69 = arith.mulf %25, %29 : vector<2x128xf32>
    %c3_i32 = arith.constant 3 : i32
    %70 = vector.broadcast %c3_i32 : i32 to vector<2x128xi32>
    %71 = arith.cmpi eq, %6, %70 : vector<2x128xi32>
    %cst_19 = arith.constant 0.000000e+00 : f32
    %72 = vector.broadcast %cst_19 : f32 to vector<2x128xf32>
    %73 = arith.select %71, %69, %72 : vector<2x128xi1>, vector<2x128xf32>
    %cst_20 = arith.constant dense<0.000000e+00> : vector<128xf32>
    %74 = vector.multi_reduction <add>, %73, %cst_20 [0] : vector<2x128xf32> to vector<128xf32>
    %75 = vector.shape_cast %74 : vector<128xf32> to vector<1x128xf32>
    %cst_21 = arith.constant dense<0.000000e+00> : vector<128xf32>
    %76 = vector.multi_reduction <add>, %69, %cst_21 [0] : vector<2x128xf32> to vector<128xf32>
    %77 = vector.shape_cast %76 : vector<128xf32> to vector<1x128xf32>
    %78 = arith.extui %71 : vector<2x128xi1> to vector<2x128xi32>
    %79 = arith.sitofp %78 : vector<2x128xi32> to vector<2x128xf32>
    %cst_22 = arith.constant dense<0.000000e+00> : vector<128xf32>
    %80 = vector.multi_reduction <add>, %79, %cst_22 [0] : vector<2x128xf32> to vector<128xf32>
    %81 = vector.shape_cast %80 : vector<128xf32> to vector<1x128xf32>
    %82 = tpu.concatenate %36, %49, %62, %75 in 0 : vector<1x128xf32>, vector<1x128xf32>, vector<1x128xf32>, vector<1x128xf32> -> vector<4x128xf32>
    %83 = tpu.concatenate %38, %51, %64, %77 in 0 : vector<1x128xf32>, vector<1x128xf32>, vector<1x128xf32>, vector<1x128xf32> -> vector<4x128xf32>
    %84 = tpu.concatenate %42, %55, %68, %81 in 0 : vector<1x128xf32>, vector<1x128xf32>, vector<1x128xf32>, vector<1x128xf32> -> vector<4x128xf32>
    %c0_23 = arith.constant 0 : index
    %c0_24 = arith.constant 0 : index
    %c0_25 = arith.constant 0 : index
    %c0_26 = arith.constant 0 : index
    %85 = vector.load %arg5[%c0_23, %c0_24, %c0_25, %c0_26] : memref<1x1x12x128xf32, #tpu.memory_space<vmem>>, vector<1x1x4x128xf32>
    %86 = vector.shape_cast %85 : vector<1x1x4x128xf32> to vector<4x128xf32>
    %87 = arith.addf %86, %82 : vector<4x128xf32>
    %c0_27 = arith.constant 0 : index
    %c0_28 = arith.constant 0 : index
    %c0_29 = arith.constant 0 : index
    %c0_30 = arith.constant 0 : index
    %88 = vector.load %arg5[%c0_27, %c0_28, %c0_29, %c0_30] : memref<1x1x12x128xf32, #tpu.memory_space<vmem>>, vector<1x1x4x128xf32>
    %89 = vector.shape_cast %88 : vector<1x1x4x128xf32> to vector<4x128xf32>
    %90 = vector.shape_cast %87 : vector<4x128xf32> to vector<1x1x4x128xf32>
    tpu.vector_store %arg5[%c0_27, %c0_28, %c0_29, %c0_30], %90 {strides = array<i32>} : memref<1x1x12x128xf32, #tpu.memory_space<vmem>>, vector<1x1x4x128xf32>,
    %c0_31 = arith.constant 0 : index
    %c0_32 = arith.constant 0 : index
    %c4 = arith.constant 4 : index
    %c0_33 = arith.constant 0 : index
    %91 = vector.load %arg5[%c0_31, %c0_32, %c4, %c0_33] : memref<1x1x12x128xf32, #tpu.memory_space<vmem>>, vector<1x1x4x128xf32>
    %92 = vector.shape_cast %91 : vector<1x1x4x128xf32> to vector<4x128xf32>
    %93 = arith.addf %92, %83 : vector<4x128xf32>
    %c0_34 = arith.constant 0 : index
    %c0_35 = arith.constant 0 : index
    %c4_36 = arith.constant 4 : index
    %c0_37 = arith.constant 0 : index
    %94 = vector.load %arg5[%c0_34, %c0_35, %c4_36, %c0_37] : memref<1x1x12x128xf32, #tpu.memory_space<vmem>>, vector<1x1x4x128xf32>
    %95 = vector.shape_cast %94 : vector<1x1x4x128xf32> to vector<4x128xf32>
    %96 = vector.shape_cast %93 : vector<4x128xf32> to vector<1x1x4x128xf32>
    tpu.vector_store %arg5[%c0_34, %c0_35, %c4_36, %c0_37], %96 {strides = array<i32>} : memref<1x1x12x128xf32, #tpu.memory_space<vmem>>, vector<1x1x4x128xf32>,
    %c0_38 = arith.constant 0 : index
    %c0_39 = arith.constant 0 : index
    %c8 = arith.constant 8 : index
    %c0_40 = arith.constant 0 : index
    %97 = vector.load %arg5[%c0_38, %c0_39, %c8, %c0_40] : memref<1x1x12x128xf32, #tpu.memory_space<vmem>>, vector<1x1x4x128xf32>
    %98 = vector.shape_cast %97 : vector<1x1x4x128xf32> to vector<4x128xf32>
    %99 = arith.addf %98, %84 : vector<4x128xf32>
    %c0_41 = arith.constant 0 : index
    %c0_42 = arith.constant 0 : index
    %c8_43 = arith.constant 8 : index
    %c0_44 = arith.constant 0 : index
    %100 = vector.load %arg5[%c0_41, %c0_42, %c8_43, %c0_44] : memref<1x1x12x128xf32, #tpu.memory_space<vmem>>, vector<1x1x4x128xf32>
    %101 = vector.shape_cast %100 : vector<1x1x4x128xf32> to vector<4x128xf32>
    %102 = vector.shape_cast %99 : vector<4x128xf32> to vector<1x1x4x128xf32>
    tpu.vector_store %arg5[%c0_41, %c0_42, %c8_43, %c0_44], %102 {strides = array<i32>} : memref<1x1x12x128xf32, #tpu.memory_space<vmem>>, vector<1x1x4x128xf32>,
    return
  }
  func.func @transform_0(%arg0: i32, %arg1: i32, %arg2: i32) -> (i32, i32, i32, i32) {
    %c1_i32 = arith.constant 1 : i32
    %0 = arith.muli %arg1, %c1_i32 : i32
    %1 = arith.addi %0, %arg2 : i32
    %c0_i32 = arith.constant 0 : i32
    %c0_i32_0 = arith.constant 0 : i32
    %c0_i32_1 = arith.constant 0 : i32
    return %arg0, %c0_i32, %1, %c0_i32_0 : i32, i32, i32, i32
  }
  func.func @transform_1(%arg0: i32, %arg1: i32, %arg2: i32) -> (i32, i32, i32) {
    %c1_i32 = arith.constant 1 : i32
    %0 = arith.muli %arg1, %c1_i32 : i32
    %1 = arith.addi %0, %arg2 : i32
    %c0_i32 = arith.constant 0 : i32
    %c0_i32_0 = arith.constant 0 : i32
    return %arg0, %1, %c0_i32 : i32, i32, i32
  }
  func.func @transform_2(%arg0: i32, %arg1: i32, %arg2: i32) -> (i32, i32, i32, i32) {
    %c0_i32 = arith.constant 0 : i32
    %c0_i32_0 = arith.constant 0 : i32
    %c0_i32_1 = arith.constant 0 : i32
    return %arg0, %arg1, %c0_i32, %c0_i32_0 : i32, i32, i32, i32
  }
}

</mosaic_0001>

<llo_original>
// kernel: tpu_custom_call.1
$region0: #{tpu_custom_call.1}
  #allocation0 [shape = 'u32[]', space=smem, size = 0x4, offset = 0x4, fixed_abs, tag = 'smem constant byte address 0x4 - core index']
  #allocation1 [shape = 'u32[144,128]{1,0:T(1,128)}', space=vmem, size = 0x12000, scoped, tag = 'internal scratch']
  %s0 = inlined_call_operand.hbm [shape: f32[2,4,2,128], index: 0, kind: input, shape index: {}]
  %s1 = inlined_call_operand.hbm [shape: s32[2,2,128], index: 1, kind: input, shape index: {}]
  %s2 = inlined_call_operand.vmem [shape: f32[2,1,12,128], index: 2, kind: output, shape index: {}]
  %s3 = sld [smem:[#allocation0]]
  $region53: #{tpu_custom_call.1} parent=0
    _
  %s5 = ssub.s32 1, %s3
  %s6 = scalar_select 0, %s5, %s3
  $region1: #{tpu_custom_call.1} parent=0
    #allocation2 [shape = 'u8[8192]{0}', space=vmem, size = 0x2000, scoped, tag = 'input window, operand 0']
    #allocation3 [shape = 's32[2]{0}', space=sflag, size = 0x8, scoped, tag = 'scoped memory for tpu_custom_call.1']
    #allocation4 [shape = 'u8[2048]{0}', space=vmem, size = 0x800, scoped, tag = 'input window, operand 1']
    #allocation5 [shape = 's32[2]{0}', space=sflag, size = 0x8, scoped, tag = 'scoped memory for tpu_custom_call.1']
    %7 = vsyncpa [#allocation3], 0
    %s8 = scalar_lea.sflag [#allocation3], 1
    %9 = vsyncpa %s8, 0
    %10 = vsyncpa [#allocation5], 0
    %s11 = scalar_lea.sflag [#allocation5], 1
    %12 = vsyncpa %s11, 0
    loop: start=0, step=1, limit=4
    $region2: #{tpu_custom_call.1} parent=1 // loop_pre_header
      _
    $region3: #{tpu_custom_call.1} parent=1 // loop_header
      %s14 = sphi 0, %s18
      %p15 = scmp.ge.s32.totalorder %s14, 4
      %s21 = sphi 0, %s40
      %s22 = sphi 0, %s36
      %s23 = sphi 0, %s32
      %s24 = sphi 0, %s21
      %s25 = sphi 0, %s22
      %s26 = sphi 0, %s23
      %s27 = sphi 0, %s24
      %s28 = sphi 0, %s25
      %s29 = sphi 0, %s26
      %s47 = sphi 0, %s49
      %s50 = sphi 0, %s47
      %s51 = sphi 0, %s50
      %s67 = sphi 0, %s51
      %s77 = sphi 0, %s79
      %s80 = sphi 0, %s77
      %s81 = sphi 0, %s80
      %s97 = sphi 0, %s81
      %s105 = sphi 0, %s107
      %s108 = sphi 0, %s105
      %s109 = sphi 0, %s108
      %s125 = sphi 0, %s109
    $region4: #{tpu_custom_call.1} parent=1 // loop_header_branch
      %17 = sbr.rel (%p15) target = $region8
    $region5: #{tpu_custom_call.1} parent=1 // loop_body
      %s19 = ssub.s32 %s14, 1
      %s20 = ssub.s32 %s14, 2
      %s30 = sadd.s32 1, %s23
      %p31 = scmp.ge.s32.totalorder %s30, 1
      %s32 = scalar_select %p31, 0, %s30
      %s33 = sadd.s32 1, %s22
      %s34 = scalar_select %p31, %s33, %s22
      %p35 = scmp.ge.s32.totalorder %s34, 1
      %s36 = scalar_select %p35, 0, %s34
      %s37 = sadd.s32 1, %s21
      %s38 = scalar_select %p35, %s37, %s21
      %p39 = scmp.ge.s32.totalorder %s38, 2
      %s40 = scalar_select %p39, 0, %s38
      %s41 = sadd.s32 %s22, %s23
      %s42 = sadd.s32 %s36, %s32
      %s43 = ssub.s32 %s21, %s40
      %s44 = ssub.s32 %s41, %s42
      %s45 = sor.u32 %s43, %s44
      %p46 = scmp.eq.s32.totalorder %s45, 0
      %s48 = sadd.s32 %s47, 1
      %s49 = scalar_select %p46, %s47, %s48
      %p52 = pneg %p46
      %p53 = scmp.eq.s32.totalorder %s14, 1
      %p54 = por %p52, %p53
      %p55 = scmp.ne.s32.totalorder %s47, %s50
      %p56 = scmp.eq.s32.totalorder %s14, 0
      %p57 = por %p55, %p56
      %p58 = scmp.ne.s32.totalorder %s47, %s50
      %p59 = scmp.eq.s32.totalorder %s19, 1
      %p60 = por %p58, %p59
      %p61 = scmp.ne.s32.totalorder %s50, %s51
      %p62 = scmp.eq.s32.totalorder %s19, 0
      %p63 = por %p61, %p62
      %p64 = scmp.ne.s32.totalorder %s50, %s51
      %p65 = scmp.eq.s32.totalorder %s20, 1
      %p66 = por %p64, %p65
      %p68 = scmp.ne.s32.totalorder %s51, %s67
      %p69 = scmp.eq.s32.totalorder %s20, 0
      %p70 = por %p68, %p69
      %s71 = sadd.s32 %s22, %s23
      %s72 = sadd.s32 %s36, %s32
      %s73 = ssub.s32 %s21, %s40
      %s74 = ssub.s32 %s71, %s72
      %s75 = sor.u32 %s73, %s74
      %p76 = scmp.eq.s32.totalorder %s75, 0
      %s78 = sadd.s32 %s77, 1
      %s79 = scalar_select %p76, %s77, %s78
      %p82 = pneg %p76
      %p83 = scmp.eq.s32.totalorder %s14, 1
      %p84 = por %p82, %p83
      %p85 = scmp.ne.s32.totalorder %s77, %s80
      %p86 = scmp.eq.s32.totalorder %s14, 0
      %p87 = por %p85, %p86
      %p88 = scmp.ne.s32.totalorder %s77, %s80
      %p89 = scmp.eq.s32.totalorder %s19, 1
      %p90 = por %p88, %p89
      %p91 = scmp.ne.s32.totalorder %s80, %s81
      %p92 = scmp.eq.s32.totalorder %s19, 0
      %p93 = por %p91, %p92
      %p94 = scmp.ne.s32.totalorder %s80, %s81
      %p95 = scmp.eq.s32.totalorder %s20, 1
      %p96 = por %p94, %p95
      %p98 = scmp.ne.s32.totalorder %s81, %s97
      %p99 = scmp.eq.s32.totalorder %s20, 0
      %p100 = por %p98, %p99
      %s101 = ssub.s32 %s21, %s40
      %s102 = ssub.s32 %s22, %s36
      %s103 = sor.u32 %s101, %s102
      %p104 = scmp.eq.s32.totalorder %s103, 0
      %s106 = sadd.s32 %s105, 1
      %s107 = scalar_select %p104, %s105, %s106
      %p110 = pneg %p104
      %p111 = scmp.eq.s32.totalorder %s14, 1
      %p112 = por %p110, %p111
      %p113 = scmp.ne.s32.totalorder %s105, %s108
      %p114 = scmp.eq.s32.totalorder %s14, 0
      %p115 = por %p113, %p114
      %p116 = scmp.ne.s32.totalorder %s105, %s108
      %p117 = scmp.eq.s32.totalorder %s19, 1
      %p118 = por %p116, %p117
      %p119 = scmp.ne.s32.totalorder %s108, %s109
      %p120 = scmp.eq.s32.totalorder %s19, 0
      %p121 = por %p119, %p120
      %p122 = scmp.ne.s32.totalorder %s108, %s109
      %p123 = scmp.eq.s32.totalorder %s20, 1
      %p124 = por %p122, %p123
      %p126 = scmp.ne.s32.totalorder %s109, %s125
      %p127 = scmp.eq.s32.totalorder %s20, 0
      %p128 = por %p126, %p127
      %p129 = scmp.le.s32.totalorder 1, %s14
      %p130 = scmp.lt.s32.totalorder %s14, 3
      %p131 = pnand %p129, %p130
      %p132 = pneg %p131
      // Predicated region
      $region9: #{tpu_custom_call.1} parent=5 // pred_check
        _
      $region10: #{tpu_custom_call.1} parent=5 // pred_check_branch
        %134 = sbr.rel (%p131) target = $region12
      $region11: #{tpu_custom_call.1} parent=5 // pred_region
        %s135 = ssub.s32 %s14, 1
      $region12: #{tpu_custom_call.1} parent=5 // pred_fallthru
        _
      %p136 = scmp.lt.s32.totalorder %s14, 2
      // Predicated region
      $region13: #{tpu_custom_call.1} parent=5 // pred_check
        %p137 = pneg %p136
      $region14: #{tpu_custom_call.1} parent=5 // pred_check_branch
        %139 = sbr.rel (%p137) target = $region16
      $region15: #{tpu_custom_call.1} parent=5 // pred_region
        // Predicated region
        $region17: #{tpu_custom_call.1} parent=15 // pred_check
          %p140 = pneg %p57
        $region18: #{tpu_custom_call.1} parent=15 // pred_check_branch
          %142 = sbr.rel (%p140) target = $region20
        $region19: #{tpu_custom_call.1} parent=15 // pred_region
          %s143 = sand.u32 %s47, 1
          %s144 = scalar_lea.sflag [#allocation3], %s143
          %s145 = sand.u32 %s47, 1
          %s146 = smul.addr %s145, 8
          %s147 = scalar_lea.vmem [#allocation2], %s146
          %s148 = sadd.s32 %s22, %s23
          %s150 = ssub.s32 128, 128
          %151 = vsyncadd %s144, %s150
          %s152 = smul.addr %s21, 4
          %s153 = sadd.s32 %s148, %s152
          %s154 = smul.addr %s153, 32
          %s155 = scalar_lea.hbm %s0, %s154
          %s156 = sshll.u32 %s147, 4
          %s157 = int_to_ptr.vmem [resolvable:$true] %s156
          %162 = dma.hbm_to_vmem [thread:$0]  %s155, 128, %s157, %s144, 32, 32, 2
        $region20: #{tpu_custom_call.1} parent=15 // pred_fallthru
          _
        // Predicated region
        $region21: #{tpu_custom_call.1} parent=15 // pred_check
          %p163 = pneg %p87
        $region22: #{tpu_custom_call.1} parent=15 // pred_check_branch
          %165 = sbr.rel (%p163) target = $region24
        $region23: #{tpu_custom_call.1} parent=15 // pred_region
          %s166 = sand.u32 %s77, 1
          %s167 = scalar_lea.sflag [#allocation5], %s166
          %s168 = sand.u32 %s77, 1
          %s169 = smul.addr %s168, 2
          %s170 = scalar_lea.vmem [#allocation4], %s169
          %s171 = sadd.s32 %s22, %s23
          %s173 = ssub.s32 32, 32
          %174 = vsyncadd %s167, %s173
          %s175 = sadd.s32 %s171, %s21
          %s176 = smul.addr %s175, 32
          %s177 = scalar_lea.hbm %s1, %s176
          %s179 = sshll.u32 %s170, 4
          %s180 = int_to_ptr.vmem [resolvable:$true] %s179
          %182 = dma.hbm_to_vmem [thread:$0]  %s177, 32, %s180, %s167
        $region24: #{tpu_custom_call.1} parent=15 // pred_fallthru
          _
      $region16: #{tpu_custom_call.1} parent=5 // pred_fallthru
        _
      %p183 = scmp.le.s32.totalorder 1, %s14
      %p184 = scmp.lt.s32.totalorder %s14, 3
      %p185 = pnand %p183, %p184
      %p186 = pneg %p185
      // Predicated region
      $region25: #{tpu_custom_call.1} parent=5 // pred_check
        _
      $region26: #{tpu_custom_call.1} parent=5 // pred_check_branch
        %188 = sbr.rel (%p185) target = $region28
      $region27: #{tpu_custom_call.1} parent=5 // pred_region
        %s189 = ssub.s32 %s14, 1
        %s190 = sand.u32 %s50, 1
        %s191 = scalar_lea.sflag [#allocation3], %s190
        %s192 = sand.u32 %s50, 1
        %s193 = smul.addr %s192, 8
        %s194 = scalar_lea.vmem [#allocation2], %s193
        // Predicated region
        $region29: #{tpu_custom_call.1} parent=27 // pred_check
          %p195 = pneg %p63
        $region30: #{tpu_custom_call.1} parent=27 // pred_check_branch
          %197 = sbr.rel (%p195) target = $region32
        $region31: #{tpu_custom_call.1} parent=27 // pred_region
          %198 = dma.done %s191, 128
        $region32: #{tpu_custom_call.1} parent=27 // pred_fallthru
          _
        %s199 = sand.u32 %s80, 1
        %s200 = scalar_lea.sflag [#allocation5], %s199
        %s201 = sand.u32 %s80, 1
        %s202 = smul.addr %s201, 2
        %s203 = scalar_lea.vmem [#allocation4], %s202
        // Predicated region
        $region33: #{tpu_custom_call.1} parent=27 // pred_check
          %p204 = pneg %p93
        $region34: #{tpu_custom_call.1} parent=27 // pred_check_branch
          %206 = sbr.rel (%p204) target = $region36
        $region35: #{tpu_custom_call.1} parent=27 // pred_region
          %207 = dma.done %s200, 32
        $region36: #{tpu_custom_call.1} parent=27 // pred_fallthru
          _
        %s208 = sand.u32 %s50, 1
        %s209 = scalar_lea.sflag [#allocation3], %s208
        %s210 = sand.u32 %s50, 1
        %s211 = smul.addr %s210, 8
        %s212 = scalar_lea.vmem [#allocation2], %s211
        %p213 = pneg %p63
        %p214 = pneg %p60
        %s215 = sand.u32 %s80, 1
        %s216 = scalar_lea.sflag [#allocation5], %s215
        %s217 = sand.u32 %s80, 1
        %s218 = smul.addr %s217, 2
        %s219 = scalar_lea.vmem [#allocation4], %s218
        %p220 = pneg %p93
        %p221 = pneg %p90
        %p222 = pneg %p121
        %p223 = pneg %p118
        %p224 = scmp.lt.s32.totalorder %s24, 1
        %s225 = scalar_select %p224, %s24, 1
        %p226 = scmp.lt.s32.totalorder %s25, 0
        %s227 = scalar_select %p226, %s25, 0
        %s228 = smul.addr %s227, 2
        %s229 = smul.addr %s225, 2
        %s230 = sadd.s32 %s228, %s229
        %s231 = smul.addr %s230, 8
        %s232 = scalar_lea.vmem %s2, %s231
        %s233 = sadd.s32 %s25, %s26
        %s234 = sadd.s32 %s25, %s26
        %p235 = scmp.lt.s32.totalorder %s24, 1
        %s236 = scalar_select %p235, %s24, 1
        %p237 = scmp.lt.s32.totalorder %s25, 0
        %s238 = scalar_select %p237, %s25, 0
        %s239 = smul.addr %s238, 2
        %s240 = smul.addr %s236, 2
        %s241 = sadd.s32 %s239, %s240
        %s242 = smul.addr %s241, 8
        %s243 = scalar_lea.vmem %s2, %s242
        %p244 = scmp.eq.s32.totalorder %s26, 0
        // Predicated region
        $region37: #{tpu_custom_call.1} parent=27 // pred_check
          %p245 = pneg %p244
        $region38: #{tpu_custom_call.1} parent=27 // pred_check_branch
          %247 = sbr.rel (%p245) target = $region40
        $region39: #{tpu_custom_call.1} parent=27 // pred_region
          %248 = vst [vmem:[%s243] sm:$0xff] 0.0
          %249 = vst [vmem:[%s243 + $0x8] sm:$0xf] 0.0
        $region40: #{tpu_custom_call.1} parent=27 // pred_fallthru
          _
        %v250 = vld [vmem:[%s194] sm:$0x3]
        %v251 = vld [vmem:[%s194 + $0x2] sm:$0x3]
        %v252 = vld [vmem:[%s194 + $0x4] sm:$0x3]
        %v253 = vld [vmem:[%s194 + $0x6] sm:$0x3]
        %v254 = vld [vmem:[%s203] sm:$0x3]
        %v255 = vmax.f32 %v250, %v251
        %v256 = vmax.f32 %v255, %v252
        %v257 = vmax.f32 %v256, %v253
        %v258 = vsub.f32 %v250, %v257
        %v259 = vmul.f32 %v258, 1.442695
        %v260 = vpow.pop %v259
        %v261 = vsub.f32 %v251, %v257
        %v262 = vmul.f32 %v261, 1.442695
        %v263 = vpow.pop %v262
        %v264 = vsub.f32 %v252, %v257
        %v265 = vmul.f32 %v264, 1.442695
        %v266 = vpow.pop %v265
        %v267 = vsub.f32 %v253, %v257
        %v268 = vmul.f32 %v267, 1.442695
        %v269 = vpow.pop %v268
        %v270 = vadd.f32 %v260, %v263
        %v271 = vadd.f32 %v270, %v266
        %v272 = vadd.f32 %v271, %v269
        %v273 = vrcp.pop %v272
        %v274 = vmul.f32 %v260, %v273
        %vm275 = vcmp.eq.s32.totalorder %v254, 0
        %v276 = vsel %vm275, %v274, 0.0
        %vm277 = vcmask 1041408
        %v278 = vsel %vm277, %v276, 0.0
        %v279 = vrot.slane %v278, 4
        %v280 = vadd.f32 %v278, %v279
        %v281 = vrot.slane %v280, 2
        %v282 = vadd.f32 %v280, %v281
        %v283 = vrot.slane %v282, 1
        %v284 = vadd.f32 %v282, %v283
        %v285 = vsel %vm277, %v274, 0.0
        %v286 = vrot.slane %v285, 4
        %v287 = vadd.f32 %v285, %v286
        %v288 = vrot.slane %v287, 2
        %v289 = vadd.f32 %v287, %v288
        %v290 = vrot.slane %v289, 1
        %v291 = vadd.f32 %v289, %v290
        %v292 = vsel %vm275, 1, 0
        %v293 = vcvt.s32.f32 %v292
        %v294 = vsel %vm277, %v293, 0.0
        %v295 = vrot.slane %v294, 4
        %v296 = vadd.f32 %v294, %v295
        %v297 = vrot.slane %v296, 2
        %v298 = vadd.f32 %v296, %v297
        %v299 = vrot.slane %v298, 1
        %v300 = vadd.f32 %v298, %v299
        %v301 = vmul.f32 %v263, %v273
        %vm302 = vcmp.eq.s32.totalorder %v254, 1
        %v303 = vsel %vm302, %v301, 0.0
        %v304 = vsel %vm277, %v303, 0.0
        %v305 = vrot.slane %v304, 4
        %v306 = vadd.f32 %v304, %v305
        %v307 = vrot.slane %v306, 2
        %v308 = vadd.f32 %v306, %v307
        %v309 = vrot.slane %v308, 1
        %v310 = vadd.f32 %v308, %v309
        %v311 = vsel %vm277, %v301, 0.0
        %v312 = vrot.slane %v311, 4
        %v313 = vadd.f32 %v311, %v312
        %v314 = vrot.slane %v313, 2
        %v315 = vadd.f32 %v313, %v314
        %v316 = vrot.slane %v315, 1
        %v317 = vadd.f32 %v315, %v316
        %v318 = vsel %vm302, 1, 0
        %v319 = vcvt.s32.f32 %v318
        %v320 = vsel %vm277, %v319, 0.0
        %v321 = vrot.slane %v320, 4
        %v322 = vadd.f32 %v320, %v321
        %v323 = vrot.slane %v322, 2
        %v324 = vadd.f32 %v322, %v323
        %v325 = vrot.slane %v324, 1
        %v326 = vadd.f32 %v324, %v325
        %v327 = vmul.f32 %v266, %v273
        %vm328 = vcmp.eq.s32.totalorder %v254, 2
        %v329 = vsel %vm328, %v327, 0.0
        %v330 = vsel %vm277, %v329, 0.0
        %v331 = vrot.slane %v330, 4
        %v332 = vadd.f32 %v330, %v331
        %v333 = vrot.slane %v332, 2
        %v334 = vadd.f32 %v332, %v333
        %v335 = vrot.slane %v334, 1
        %v336 = vadd.f32 %v334, %v335
        %v337 = vsel %vm277, %v327, 0.0
        %v338 = vrot.slane %v337, 4
        %v339 = vadd.f32 %v337, %v338
        %v340 = vrot.slane %v339, 2
        %v341 = vadd.f32 %v339, %v340
        %v342 = vrot.slane %v341, 1
        %v343 = vadd.f32 %v341, %v342
        %v344 = vsel %vm328, 1, 0
        %v345 = vcvt.s32.f32 %v344
        %v346 = vsel %vm277, %v345, 0.0
        %v347 = vrot.slane %v346, 4
        %v348 = vadd.f32 %v346, %v347
        %v349 = vrot.slane %v348, 2
        %v350 = vadd.f32 %v348, %v349
        %v351 = vrot.slane %v350, 1
        %v352 = vadd.f32 %v350, %v351
        %v353 = vmul.f32 %v269, %v273
        %vm354 = vcmp.eq.s32.totalorder %v254, 3
        %v355 = vsel %vm354, %v353, 0.0
        %v356 = vsel %vm277, %v355, 0.0
        %v357 = vrot.slane %v356, 4
        %v358 = vadd.f32 %v356, %v357
        %v359 = vrot.slane %v358, 2
        %v360 = vadd.f32 %v358, %v359
        %v361 = vrot.slane %v360, 1
        %v362 = vadd.f32 %v360, %v361
        %v363 = vsel %vm277, %v353, 0.0
        %v364 = vrot.slane %v363, 4
        %v365 = vadd.f32 %v363, %v364
        %v366 = vrot.slane %v365, 2
        %v367 = vadd.f32 %v365, %v366
        %v368 = vrot.slane %v367, 1
        %v369 = vadd.f32 %v367, %v368
        %v370 = vsel %vm354, 1, 0
        %v371 = vcvt.s32.f32 %v370
        %v372 = vsel %vm277, %v371, 0.0
        %v373 = vrot.slane %v372, 4
        %v374 = vadd.f32 %v372, %v373
        %v375 = vrot.slane %v374, 2
        %v376 = vadd.f32 %v374, %v375
        %v377 = vrot.slane %v376, 1
        %v378 = vadd.f32 %v376, %v377
        %vm379 = vcmask 1040384
        %v380 = vsel %vm379, %v284, %v310
        %v381 = vsel %vm277, %v380, %v336
        %vm382 = vcmask 1042432
        %v383 = vsel %vm382, %v381, %v362
        %v384 = vsel %vm379, %v291, %v317
        %v385 = vsel %vm277, %v384, %v343
        %v386 = vsel %vm382, %v385, %v369
        %v387 = vsel %vm379, %v300, %v326
        %v388 = vsel %vm277, %v387, %v352
        %v389 = vsel %vm382, %v388, %v378
        %v390 = vld [vmem:[%s243] sm:$0xf]
        %v391 = vadd.f32 %v390, %v383
        %392 = vst [vmem:[%s243] sm:$0xf] %v391
        %v393 = vld [vmem:[%s243 + $0x4] sm:$0xf]
        %v394 = vadd.f32 %v393, %v386
        %395 = vst [vmem:[%s243 + $0x4] sm:$0xf] %v394
        %v396 = vld [vmem:[%s243 + $0x8] sm:$0xf]
        %v397 = vadd.f32 %v396, %v389
        %398 = vst [vmem:[%s243 + $0x8] sm:$0xf] %v397
        %p399 = scmp.lt.s32.totalorder %s24, 1
        %s400 = scalar_select %p399, %s24, 1
        %p401 = scmp.lt.s32.totalorder %s25, 0
        %s402 = scalar_select %p401, %s25, 0
        %s403 = smul.addr %s402, 2
        %s404 = smul.addr %s400, 2
        %s405 = sadd.s32 %s403, %s404
        %s406 = smul.addr %s405, 8
        %s407 = scalar_lea.vmem %s2, %s406
        // Predicated region
        $region41: #{tpu_custom_call.1} parent=27 // pred_check
          %p408 = pneg %p118
        $region42: #{tpu_custom_call.1} parent=27 // pred_check_branch
          %410 = sbr.rel (%p408) target = $region44
        $region43: #{tpu_custom_call.1} parent=27 // pred_region
          _
        $region44: #{tpu_custom_call.1} parent=27 // pred_fallthru
          _
      $region28: #{tpu_custom_call.1} parent=5 // pred_fallthru
        _
      %p411 = scmp.le.s32.totalorder 2, %s14
      // Predicated region
      $region45: #{tpu_custom_call.1} parent=5 // pred_check
        %p412 = pneg %p411
      $region46: #{tpu_custom_call.1} parent=5 // pred_check_branch
        %414 = sbr.rel (%p412) target = $region48
      $region47: #{tpu_custom_call.1} parent=5 // pred_region
        %s415 = ssub.s32 %s14, 2
        // Predicated region
        $region49: #{tpu_custom_call.1} parent=47 // pred_check
          %p416 = pneg %p124
        $region50: #{tpu_custom_call.1} parent=47 // pred_check_branch
          %418 = sbr.rel (%p416) target = $region52
        $region51: #{tpu_custom_call.1} parent=47 // pred_region
          %p419 = scmp.lt.s32.totalorder %s27, 1
          %s420 = scalar_select %p419, %s27, 1
          %p421 = scmp.lt.s32.totalorder %s28, 0
          %s422 = scalar_select %p421, %s28, 0
          %s423 = smul.addr %s422, 2
          %s424 = smul.addr %s420, 2
          %s425 = sadd.s32 %s423, %s424
          %s426 = smul.addr %s425, 8
          %s427 = scalar_lea.vmem %s2, %s426
        $region52: #{tpu_custom_call.1} parent=47 // pred_fallthru
          _
      $region48: #{tpu_custom_call.1} parent=5 // pred_fallthru
        _
    $region6: #{tpu_custom_call.1} parent=1 // loop_footer
      %s18 = sadd.s32 1, %s14
    $region7: #{tpu_custom_call.1} parent=1 // loop_footer_branch
      %13 = sbr.rel target = $region3
    $region8: #{tpu_custom_call.1} parent=1 // loop_exit
      _
    %428 = vsyncpa [#allocation3], 1
    %s429 = scalar_lea.sflag [#allocation3], 1
    %430 = vsyncpa %s429, 1
    %431 = vsyncpa [#allocation5], 1
    %s432 = scalar_lea.sflag [#allocation5], 1
    %433 = vsyncpa %s432, 1

</llo_original>
